<compile_context>
chip_gen: v7x
topology: tpu7x:2x2x1
jax: 0.10.0
libtpu: 0.0.40
codegen_flags: <defaults>
</compile_context>

<pallas_src>
import functools

import jax
import jax.numpy as jnp
from jax import lax
from jax.experimental import pallas as pl
from jax.experimental.pallas import tpu as pltpu


def _round_up(x, m):
    return ((x + m - 1) // m) * m


def _logsumexp(x, axis):
    m = jnp.max(x, axis=axis, keepdims=True)
    return jnp.squeeze(m, axis=axis) + jnp.log(jnp.sum(jnp.exp(x - m), axis=axis))


def _vmem_estimate_bytes(t_row, t_col, d, itemsize, text_buffers):
    lane = 128
    inputs = (2 * t_row * d + max(2, int(text_buffers)) * t_col * d) * itemsize
    temps = 4 * t_row * t_col * 4                     # s + masked/exp f32 temporaries
    scratch = 2 * t_row * lane * 4                    # (Tr, 1) f32 pads to 128 lanes
    outs = 2 * (t_row * lane * 4 + 8 * t_col * 4)     # double-buffered output tiles
    return inputs + temps + scratch + outs


def _contrastive_loss_kernel(
    scale_ref,     # SMEM (1, 1) f32      : exp(logit_scale)
    img_ref,       # VMEM (Tr, D)         : image row tile (block i, resident over j)
    txt_ref,       # VMEM (Tc, D)         : text col tile  (block j, streamed)
    row_out_ref,   # VMEM (1, Tr, 1) f32  : per-row (lse_row - 2*diag), block i
    col_out_ref,   # VMEM (1, 1, 1, Tc) f32 : per-(i, j) partial column LSE
    row_max_ref,   # VMEM (Tr, 1) f32     : running row max    (reset at j == 0)
    row_sum_ref,   # VMEM (Tr, 1) f32     : running row sumexp (reset at j == 0)
    *, t_row, t_col, n_valid, pad_rows, pad_cols,
):
    i = pl.program_id(0)
    j = pl.program_id(1)
    n_row_blocks = pl.num_programs(0)
    n_col_blocks = pl.num_programs(1)
    neg_inf = jnp.float32(-jnp.inf)
    scale = scale_ref[0, 0]

    # Logits tile on the MXU: contract dim 1 of both operands (no transpose),
    # native (bf16) inputs, f32 accumulation.
    s = lax.dot_general(
        img_ref[...], txt_ref[...], (((1,), (1,)), ((), ())),
        preferred_element_type=jnp.float32,
    ) * scale                                                       # (Tr, Tc) f32

    # ---------------- per-row-block state init (j is the inner axis) ----------------
    @pl.when(j == 0)
    def _():
        row_max_ref[...] = jnp.full_like(row_max_ref, neg_inf)
        row_sum_ref[...] = jnp.zeros_like(row_sum_ref)
        row_out_ref[...] = jnp.zeros_like(row_out_ref)

    # ---------------- image -> text: online row LSE across j ----------------
    def _row_update(s_r):
        m_old = row_max_ref[...]
        m_new = jnp.maximum(m_old, jnp.max(s_r, axis=1, keepdims=True))
        row_sum_ref[...] = (row_sum_ref[...] * jnp.exp(m_old - m_new)
                            + jnp.sum(jnp.exp(s_r - m_new), axis=1, keepdims=True))
        row_max_ref[...] = m_new

    if pad_cols:
        # Only the last column block holds padded columns -> mask only there.
        @pl.when(j < n_col_blocks - 1)
        def _():
            _row_update(s)

        @pl.when(j == n_col_blocks - 1)
        def _():
            col_ids = j * t_col + lax.broadcasted_iota(jnp.int32, (1, t_col), 1)
            _row_update(jnp.where(col_ids < n_valid, s, neg_inf))
    else:
        _row_update(s)

    # ------- text -> image: per-tile partial column LSE (combined in epilogue) -------
    def _col_partial(s_c):
        cm = jnp.max(s_c, axis=0, keepdims=True)                          # (1, Tc)
        cl = cm + jnp.log(jnp.sum(jnp.exp(s_c - cm), axis=0, keepdims=True))
        col_out_ref[...] = cl.reshape(1, 1, 1, t_col)

    if pad_rows:
        @pl.when(i < n_row_blocks - 1)
        def _():
            _col_partial(s)

        @pl.when(i == n_row_blocks - 1)
        def _():
            row_ids = i * t_row + lax.broadcasted_iota(jnp.int32, (t_row, 1), 0)
            _col_partial(jnp.where(row_ids < n_valid, s, neg_inf))
    else:
        _col_partial(s)

    # ---- correct-pair (diagonal) logits, extracted from the s already in vregs.
    #      Padded diagonal entries are exactly 0 (zero-padded features): no mask. ----
    diag_lo = jnp.maximum(i * t_row, j * t_col)
    diag_hi = jnp.minimum((i + 1) * t_row, (j + 1) * t_col)

    @pl.when(diag_lo < diag_hi)
    def _():
        rg = i * t_row + lax.broadcasted_iota(jnp.int32, (t_row, t_col), 0)
        cg = j * t_col + lax.broadcasted_iota(jnp.int32, (t_row, t_col), 1)
        d = jnp.sum(jnp.where(rg == cg, s, 0.0), axis=1, keepdims=True)   # (Tr, 1)
        row_out_ref[...] += (-2.0 * d).reshape(1, t_row, 1)

    # ---------------- finalize the row LSE for this row block ----------------
    @pl.when(j == n_col_blocks - 1)
    def _():
        lse = row_max_ref[...] + jnp.log(row_sum_ref[...])                # (Tr, 1)
        row_out_ref[...] += lse.reshape(1, t_row, 1)


def standard_contrastive_loss(
    image_features, text_features, logit_scale, *,
    tile_rows=None, tile_cols=None, cast_to_bf16=True, text_buffers=3,
    vmem_budget_bytes=24 * 2**20,
):
    """Pallas equivalent of StandardContrastiveLoss.forward.

    image_features: [N, D], text_features: [N, D], logit_scale: scalar
    (pre-exp, as in the PyTorch module).  Returns a scalar f32 loss.
    """
    N, D = image_features.shape
    assert text_features.shape == (N, D)
    assert N >= 1

    # bf16 inputs halve the HBM stream and hit the bf16 MXU directly (v7x MXU is
    # bf16/fp8-only); all LSE / accumulation math stays f32 inside the kernel.
    if cast_to_bf16 and image_features.dtype == jnp.float32:
        image_features = image_features.astype(jnp.bfloat16)
    if cast_to_bf16 and text_features.dtype == jnp.float32:
        text_features = text_features.astype(jnp.bfloat16)
    itemsize = jnp.dtype(image_features.dtype).itemsize

    # ----- asymmetric tiles: MXU-width col tile, large VMEM-resident row tile -----
    if tile_cols is None:
        t_col = 256 if N >= 256 else _round_up(N, 8)
    else:
        t_col = int(tile_cols)
    if tile_rows is None:
        if N >= 128:
            cap = 1024
            while cap > 128 and _vmem_estimate_bytes(
                    cap, t_col, D, itemsize, text_buffers) > vmem_budget_bytes:
                cap //= 2
            t_row = min(cap, _round_up(N, 128))
        else:
            t_row = _round_up(N, 8)
    else:
        t_row = int(tile_rows)
    assert t_row % 8 == 0 and t_col % 8 == 0, "tiles must be multiples of 8"

    n_pad_row = _round_up(N, t_row)
    n_pad_col = _round_up(N, t_col)
    n_row_blocks = n_pad_row // t_row
    n_col_blocks = n_pad_col // t_col
    pad_rows = n_pad_row != N
    pad_cols = n_pad_col != N

    img = image_features
    txt = text_features
    if pad_rows:
        img = jnp.pad(img, ((0, n_pad_row - N), (0, 0)))
    if pad_cols:
        txt = jnp.pad(txt, ((0, n_pad_col - N), (0, 0)))

    # exp(logit_scale) hoisted out of the kernel (one scalar exp here instead of
    # one per grid step); read from SMEM inside the kernel.
    scale_arr = jnp.exp(jnp.asarray(logit_scale, jnp.float32)).reshape(1, 1)

    kernel = functools.partial(
        _contrastive_loss_kernel, t_row=t_row, t_col=t_col, n_valid=N,
        pad_rows=pad_rows, pad_cols=pad_cols)

    # Streamed text operand: 3-deep pipeline when there are enough column blocks.
    txt_index_map = lambda i, j: (j, 0)
    txt_spec = pl.BlockSpec((t_col, D), txt_index_map)
    if text_buffers and int(text_buffers) > 2 and n_col_blocks >= 3:
        try:
            txt_spec = pl.BlockSpec((t_col, D), txt_index_map,
                                    pipeline_mode=pl.Buffered(int(text_buffers)))
        except (TypeError, AttributeError):
            pass  # older jax without pipeline_mode: default double-buffering

    grid_spec = pltpu.PrefetchScalarGridSpec(
        num_scalar_prefetch=0,
        grid=(n_row_blocks, n_col_blocks),
        in_specs=[
            pl.BlockSpec(memory_space=pltpu.MemorySpace.SMEM),   # exp(logit_scale)
            pl.BlockSpec((t_row, D), lambda i, j: (i, 0)),       # image row tile (resident)
            txt_spec,                                            # text col tile (streamed)
        ],
        out_specs=[
            pl.BlockSpec((1, t_row, 1), lambda i, j: (i, 0, 0)),        # per-row partials
            pl.BlockSpec((1, 1, 1, t_col), lambda i, j: (i, j, 0, 0)),  # per-tile col LSE
        ],
        scratch_shapes=[
            pltpu.VMEM((t_row, 1), jnp.float32),   # running row max
            pltpu.VMEM((t_row, 1), jnp.float32),   # running row sumexp
        ],
    )

    # Real streamed HBM traffic: text re-streamed once per row block, image once.
    cost = pl.CostEstimate(
        flops=int(2 * n_pad_row * n_pad_col * D),
        transcendentals=int(2 * n_pad_row * n_pad_col),
        bytes_accessed=int(n_row_blocks * n_pad_col * D * itemsize
                           + n_pad_row * D * itemsize
                           + 4 * (n_pad_row + n_row_blocks * n_pad_col)),
    )

    vmem_limit = int(min(
        max(32 * 2**20,
            2 * _vmem_estimate_bytes(t_row, t_col, D, itemsize, text_buffers)),
        64 * 2**20))

    row_out, col_out = pl.pallas_call(
        kernel,
        grid_spec=grid_spec,
        out_shape=(
            jax.ShapeDtypeStruct((n_row_blocks, t_row, 1), jnp.float32),
            jax.ShapeDtypeStruct((n_row_blocks, n_col_blocks, 1, t_col), jnp.float32),
        ),
        compiler_params=pltpu.CompilerParams(
            # Row blocks are independent (per-row-block outputs, no shared
            # accumulator) -> megacore-shardable on v7x.  The column axis
            # carries the online row-LSE reduction -> "arbitrary".
            dimension_semantics=("parallel", "arbitrary"),
            vmem_limit_bytes=vmem_limit,
        ),
        cost_estimate=cost,
    )(scale_arr, img, txt)

    # ---------------- tiny JAX epilogue: O(N * n_row_blocks) ----------------
    row_vals = row_out.reshape(n_pad_row)                  # lse_row - 2*diag, per row
    col_part = col_out.reshape(n_row_blocks, n_pad_col)    # partial col LSE per row block
    col_lse = _logsumexp(col_part, axis=0)                 # exact: LSE over disjoint row chunks
    if pad_rows:
        row_vals = jnp.where(jnp.arange(n_pad_row) < N, row_vals, 0.0)
    if pad_cols:
        col_lse = jnp.where(jnp.arange(n_pad_col) < N, col_lse, 0.0)
    return (jnp.sum(row_vals) + jnp.sum(col_lse)) / jnp.float32(2 * N)


def _reference_loss(image_features, text_features, logit_scale):
    """Pure-JAX reference mirroring the PyTorch module (f32 math)."""
    logits = (image_features.astype(jnp.float32)
              @ text_features.astype(jnp.float32).T) * jnp.exp(jnp.float32(logit_scale))
    lse_r = _logsumexp(logits, axis=1)
    lse_c = _logsumexp(logits, axis=0)
    diag = jnp.diagonal(logits)
    loss_i = jnp.mean(lse_r - diag)
    loss_t = jnp.mean(lse_c - diag)
    return (loss_i + loss_t) / 2.0


if __name__ == "__main__":
    key = jax.random.PRNGKey(0)
    k1, k2, k3, k4, k5, k6 = jax.random.split(key, 6)
    logit_scale = jnp.float32(jnp.log(1.0 / 0.07))   # CLIP temperature init

    def make(k, n, d):
        x = jax.random.normal(k, (n, d), dtype=jnp.float32)
        x = x / jnp.linalg.norm(x, axis=-1, keepdims=True)
        # bf16 features (kernel and reference share identical quantized inputs)
        return x.astype(jnp.bfloat16)

    # 1) single-tile path, no padding, default tile selection.
    img1, txt1 = make(k1, 16, 32), make(k2, 16, 32)
    loss1 = jax.block_until_ready(standard_contrastive_loss(img1, txt1, logit_scale))
    ref1 = _reference_loss(img1, txt1, logit_scale)
    assert jnp.allclose(loss1, ref1, atol=2e-3, rtol=2e-3), (loss1, ref1)

    # 2) asymmetric multi-tile grid WITH row+col padding:
    #    N=40 -> rows pad to 64 (2 x 32), cols pad to 48 (3 x 16); Buffered text path.
    img2, txt2 = make(k3, 40, 32), make(k4, 40, 32)
    loss2 = jax.block_until_ready(
        standard_contrastive_loss(img2, txt2, logit_scale, tile_rows=32, tile_cols=16))
    ref2 = _reference_loss(img2, txt2, logit_scale)
    assert jnp.allclose(loss2, ref2, atol=2e-3, rtol=2e-3), (loss2, ref2)

    # 3) asymmetric multi-tile grid WITHOUT padding (no-mask fast path):
    #    N=64 -> 2 row blocks x 4 col blocks.
    img3, txt3 = make(k5, 64, 32), make(k6, 64, 32)
    loss3 = jax.block_until_ready(
        standard_contrastive_loss(img3, txt3, logit_scale, tile_rows=32, tile_cols=16))
    ref3 = _reference_loss(img3, txt3, logit_scale)
    assert jnp.allclose(loss3, ref3, atol=2e-3, rtol=2e-3), (loss3, ref3)

    print("KERNEL_OK")
</pallas_src>

<mosaic_0001>
module attributes {stable_mosaic.version = 11 : i64} {
  func.func @_contrastive_loss_kernel(%arg0: i32, %arg1: i32, %arg2: memref<1x1xf32, #tpu.memory_space<smem>>, %arg3: memref<16x32xbf16, #tpu.memory_space<vmem>>, %arg4: memref<16x32xbf16, #tpu.memory_space<vmem>>, %arg5: memref<1x16x1xf32, #tpu.memory_space<vmem>>, %arg6: memref<1x1x1x16xf32, #tpu.memory_space<vmem>>, %arg7: memref<16x1xf32, #tpu.memory_space<vmem>>, %arg8: memref<16x1xf32, #tpu.memory_space<vmem>>) attributes {dimension_semantics = [#tpu.dimension_semantics<parallel>, #tpu.dimension_semantics<arbitrary>], iteration_bounds = array<i64: 1, 1>, scalar_prefetch = 0 : i64, scratch_operands = 2 : i64, tpu.core_type = #tpu.core_type<tc>, window_params = [{transform_indices = @transform_0, window_bounds = array<i64: 1, 1>}, {transform_indices = @transform_1, window_bounds = array<i64: 16, 32>}, {transform_indices = @transform_2, window_bounds = array<i64: 16, 32>}, {transform_indices = @transform_3, window_bounds = array<i64: 1, 16, 1>}, {transform_indices = @transform_4, window_bounds = array<i64: 1, 1, 1, 16>}]} {
    %c0 = arith.constant 0 : index
    %c0_0 = arith.constant 0 : index
    %0 = memref.load %arg2[%c0, %c0_0] : memref<1x1xf32, #tpu.memory_space<smem>>
    %c0_1 = arith.constant 0 : index
    %c0_2 = arith.constant 0 : index
    %1 = vector.load %arg3[%c0_1, %c0_2] : memref<16x32xbf16, #tpu.memory_space<vmem>>, vector<16x32xbf16>
    %c0_3 = arith.constant 0 : index
    %c0_4 = arith.constant 0 : index
    %2 = vector.load %arg4[%c0_3, %c0_4] : memref<16x32xbf16, #tpu.memory_space<vmem>>, vector<16x32xbf16>
    %cst = arith.constant dense<0.000000e+00> : vector<16x16xf32>
    %3 = tpu.matmul %1, %2, %cst {dimension_numbers = #tpu.dot_dimension_numbers<[1], [1], [0], [0], [0, 0, 1, 0], [], []>} : vector<16x32xbf16>, vector<16x32xbf16>, vector<16x16xf32> -> vector<16x16xf32>
    %4 = vector.broadcast %0 : f32 to vector<16x16xf32>
    %5 = arith.mulf %3, %4 : vector<16x16xf32>
    %c0_i32 = arith.constant 0 : i32
    %6 = arith.cmpi eq, %arg1, %c0_i32 : i32
    %7 = arith.extui %6 : i1 to i32
    %cst_5 = arith.constant 0xFF800000 : f32
    %c0_i32_6 = arith.constant 0 : i32
    %8 = arith.cmpi ne, %7, %c0_i32_6 : i32
    scf.if %8 {
      %50 = vector.broadcast %cst_5 : f32 to vector<16x1xf32>
      %c0_30 = arith.constant 0 : index
      %c0_31 = arith.constant 0 : index
      %51 = vector.load %arg7[%c0_30, %c0_31] : memref<16x1xf32, #tpu.memory_space<vmem>>, vector<16x1xf32>
      tpu.vector_store %arg7[%c0_30, %c0_31], %50 {strides = array<i32>} : memref<16x1xf32, #tpu.memory_space<vmem>>, vector<16x1xf32>,
      %cst_32 = arith.constant 0.000000e+00 : f32
      %52 = vector.broadcast %cst_32 : f32 to vector<16x1xf32>
      %c0_33 = arith.constant 0 : index
      %c0_34 = arith.constant 0 : index
      %53 = vector.load %arg8[%c0_33, %c0_34] : memref<16x1xf32, #tpu.memory_space<vmem>>, vector<16x1xf32>
      tpu.vector_store %arg8[%c0_33, %c0_34], %52 {strides = array<i32>} : memref<16x1xf32, #tpu.memory_space<vmem>>, vector<16x1xf32>,
      %cst_35 = arith.constant 0.000000e+00 : f32
      %54 = vector.broadcast %cst_35 : f32 to vector<1x16x1xf32>
      %c0_36 = arith.constant 0 : index
      %c0_37 = arith.constant 0 : index
      %c0_38 = arith.constant 0 : index
      %55 = vector.load %arg5[%c0_36, %c0_37, %c0_38] : memref<1x16x1xf32, #tpu.memory_space<vmem>>, vector<1x16x1xf32>
      tpu.vector_store %arg5[%c0_36, %c0_37, %c0_38], %54 {strides = array<i32>} : memref<1x16x1xf32, #tpu.memory_space<vmem>>, vector<1x16x1xf32>,
    } else {
    }
    %c0_7 = arith.constant 0 : index
    %c0_8 = arith.constant 0 : index
    %9 = vector.load %arg7[%c0_7, %c0_8] : memref<16x1xf32, #tpu.memory_space<vmem>>, vector<16x1xf32>
    %cst_9 = arith.constant dense<0xFF800000> : vector<16xf32>
    %10 = vector.multi_reduction <maximumf>, %5, %cst_9 [1] : vector<16x16xf32> to vector<16xf32>
    %11 = vector.shape_cast %10 : vector<16xf32> to vector<16x1xf32>
    %12 = arith.maximumf %9, %11 : vector<16x1xf32>
    %c0_10 = arith.constant 0 : index
    %c0_11 = arith.constant 0 : index
    %13 = vector.load %arg8[%c0_10, %c0_11] : memref<16x1xf32, #tpu.memory_space<vmem>>, vector<16x1xf32>
    %14 = arith.subf %9, %12 : vector<16x1xf32>
    %15 = math.exp %14 : vector<16x1xf32>
    %16 = arith.mulf %13, %15 : vector<16x1xf32>
    %17 = vector.broadcast %12 : vector<16x1xf32> to vector<16x16xf32>
    %18 = arith.subf %5, %17 : vector<16x16xf32>
    %19 = math.exp %18 : vector<16x16xf32>
    %cst_12 = arith.constant dense<0.000000e+00> : vector<16xf32>
    %20 = vector.multi_reduction <add>, %19, %cst_12 [1] : vector<16x16xf32> to vector<16xf32>
    %21 = vector.shape_cast %20 : vector<16xf32> to vector<16x1xf32>
    %22 = arith.addf %16, %21 : vector<16x1xf32>
    %c0_13 = arith.constant 0 : index
    %c0_14 = arith.constant 0 : index
    %23 = vector.load %arg8[%c0_13, %c0_14] : memref<16x1xf32, #tpu.memory_space<vmem>>, vector<16x1xf32>
    tpu.vector_store %arg8[%c0_13, %c0_14], %22 {strides = array<i32>} : memref<16x1xf32, #tpu.memory_space<vmem>>, vector<16x1xf32>,
    %c0_15 = arith.constant 0 : index
    %c0_16 = arith.constant 0 : index
    %24 = vector.load %arg7[%c0_15, %c0_16] : memref<16x1xf32, #tpu.memory_space<vmem>>, vector<16x1xf32>
    tpu.vector_store %arg7[%c0_15, %c0_16], %12 {strides = array<i32>} : memref<16x1xf32, #tpu.memory_space<vmem>>, vector<16x1xf32>,
    %cst_17 = arith.constant dense<0xFF800000> : vector<16xf32>
    %25 = vector.multi_reduction <maximumf>, %5, %cst_17 [0] : vector<16x16xf32> to vector<16xf32>
    %26 = vector.shape_cast %25 : vector<16xf32> to vector<1x16xf32>
    %27 = vector.broadcast %26 : vector<1x16xf32> to vector<16x16xf32>
    %28 = arith.subf %5, %27 : vector<16x16xf32>
    %29 = math.exp %28 : vector<16x16xf32>
    %cst_18 = arith.constant dense<0.000000e+00> : vector<16xf32>
    %30 = vector.multi_reduction <add>, %29, %cst_18 [0] : vector<16x16xf32> to vector<16xf32>
    %31 = vector.shape_cast %30 : vector<16xf32> to vector<1x16xf32>
    %32 = math.log %31 : vector<1x16xf32>
    %33 = arith.addf %26, %32 : vector<1x16xf32>
    %34 = vector.shape_cast %33 : vector<1x16xf32> to vector<1x1x1x16xf32>
    %c0_19 = arith.constant 0 : index
    %c0_20 = arith.constant 0 : index
    %c0_21 = arith.constant 0 : index
    %c0_22 = arith.constant 0 : index
    %35 = vector.load %arg6[%c0_19, %c0_20, %c0_21, %c0_22] : memref<1x1x1x16xf32, #tpu.memory_space<vmem>>, vector<1x1x1x16xf32>
    tpu.vector_store %arg6[%c0_19, %c0_20, %c0_21, %c0_22], %34 {strides = array<i32>} : memref<1x1x1x16xf32, #tpu.memory_space<vmem>>, vector<1x1x1x16xf32>,
    %c16_i32 = arith.constant 16 : i32
    %36 = arith.muli %arg0, %c16_i32 : i32
    %c16_i32_23 = arith.constant 16 : i32
    %37 = arith.muli %arg1, %c16_i32_23 : i32
    %38 = arith.maxsi %36, %37 : i32
    %c1_i32 = arith.constant 1 : i32
    %39 = arith.addi %arg0, %c1_i32 : i32
    %c16_i32_24 = arith.constant 16 : i32
    %40 = arith.muli %39, %c16_i32_24 : i32
    %c1_i32_25 = arith.constant 1 : i32
    %41 = arith.addi %arg1, %c1_i32_25 : i32
    %c16_i32_26 = arith.constant 16 : i32
    %42 = arith.muli %41, %c16_i32_26 : i32
    %43 = arith.minsi %40, %42 : i32
    %44 = arith.cmpi slt, %38, %43 : i32
    %45 = arith.extui %44 : i1 to i32
    %c0_i32_27 = arith.constant 0 : i32
    %46 = arith.cmpi ne, %45, %c0_i32_27 : i32
    scf.if %46 {
      %c16_i32_30 = arith.constant 16 : i32
      %50 = arith.muli %arg0, %c16_i32_30 : i32
      %51 = tpu.iota {dimensions = array<i32: 0>} : vector<16x16xi32>
      %52 = vector.broadcast %50 : i32 to vector<16x16xi32>
      %53 = arith.addi %52, %51 : vector<16x16xi32>
      %c16_i32_31 = arith.constant 16 : i32
      %54 = arith.muli %arg1, %c16_i32_31 : i32
      %55 = tpu.iota {dimensions = array<i32: 1>} : vector<16x16xi32>
      %56 = vector.broadcast %54 : i32 to vector<16x16xi32>
      %57 = arith.addi %56, %55 : vector<16x16xi32>
      %58 = arith.cmpi eq, %53, %57 : vector<16x16xi32>
      %cst_32 = arith.constant 0.000000e+00 : f32
      %59 = vector.broadcast %cst_32 : f32 to vector<16x16xf32>
      %60 = arith.select %58, %5, %59 : vector<16x16xi1>, vector<16x16xf32>
      %cst_33 = arith.constant dense<0.000000e+00> : vector<16xf32>
      %61 = vector.multi_reduction <add>, %60, %cst_33 [1] : vector<16x16xf32> to vector<16xf32>
      %62 = vector.shape_cast %61 : vector<16xf32> to vector<16x1xf32>
      %c0_34 = arith.constant 0 : index
      %c0_35 = arith.constant 0 : index
      %c0_36 = arith.constant 0 : index
      %63 = vector.load %arg5[%c0_34, %c0_35, %c0_36] : memref<1x16x1xf32, #tpu.memory_space<vmem>>, vector<1x16x1xf32>
      %cst_37 = arith.constant -2.000000e+00 : f32
      %64 = vector.broadcast %cst_37 : f32 to vector<16x1xf32>
      %65 = arith.mulf %64, %62 : vector<16x1xf32>
      %66 = vector.shape_cast %65 : vector<16x1xf32> to vector<1x16x1xf32>
      %67 = arith.addf %63, %66 : vector<1x16x1xf32>
      %c0_38 = arith.constant 0 : index
      %c0_39 = arith.constant 0 : index
      %c0_40 = arith.constant 0 : index
      %68 = vector.load %arg5[%c0_38, %c0_39, %c0_40] : memref<1x16x1xf32, #tpu.memory_space<vmem>>, vector<1x16x1xf32>
      tpu.vector_store %arg5[%c0_38, %c0_39, %c0_40], %67 {strides = array<i32>} : memref<1x16x1xf32, #tpu.memory_space<vmem>>, vector<1x16x1xf32>,
    } else {
    }
    %c0_i32_28 = arith.constant 0 : i32
    %47 = arith.cmpi eq, %arg1, %c0_i32_28 : i32
    %48 = arith.extui %47 : i1 to i32
    %c0_i32_29 = arith.constant 0 : i32
    %49 = arith.cmpi ne, %48, %c0_i32_29 : i32
    scf.if %49 {
      %c0_30 = arith.constant 0 : index
      %c0_31 = arith.constant 0 : index
      %50 = vector.load %arg7[%c0_30, %c0_31] : memref<16x1xf32, #tpu.memory_space<vmem>>, vector<16x1xf32>
      %c0_32 = arith.constant 0 : index
      %c0_33 = arith.constant 0 : index
      %51 = vector.load %arg8[%c0_32, %c0_33] : memref<16x1xf32, #tpu.memory_space<vmem>>, vector<16x1xf32>
      %52 = math.log %51 : vector<16x1xf32>
      %53 = arith.addf %50, %52 : vector<16x1xf32>
      %c0_34 = arith.constant 0 : index
      %c0_35 = arith.constant 0 : index
      %c0_36 = arith.constant 0 : index
      %54 = vector.load %arg5[%c0_34, %c0_35, %c0_36] : memref<1x16x1xf32, #tpu.memory_space<vmem>>, vector<1x16x1xf32>
      %55 = vector.shape_cast %53 : vector<16x1xf32> to vector<1x16x1xf32>
      %56 = arith.addf %54, %55 : vector<1x16x1xf32>
      %c0_37 = arith.constant 0 : index
      %c0_38 = arith.constant 0 : index
      %c0_39 = arith.constant 0 : index
      %57 = vector.load %arg5[%c0_37, %c0_38, %c0_39] : memref<1x16x1xf32, #tpu.memory_space<vmem>>, vector<1x16x1xf32>
      tpu.vector_store %arg5[%c0_37, %c0_38, %c0_39], %56 {strides = array<i32>} : memref<1x16x1xf32, #tpu.memory_space<vmem>>, vector<1x16x1xf32>,
    } else {
    }
    return
  }
  func.func @transform_0(%arg0: i32, %arg1: i32) -> (i32, i32) {
    %c0_i32 = arith.constant 0 : i32
    %c0_i32_0 = arith.constant 0 : i32
    %c0_i32_1 = arith.constant 0 : i32
    return %c0_i32, %c0_i32_0 : i32, i32
  }
  func.func @transform_1(%arg0: i32, %arg1: i32) -> (i32, i32) {
    %c0_i32 = arith.constant 0 : i32
    %c0_i32_0 = arith.constant 0 : i32
    return %arg0, %c0_i32 : i32, i32
  }
  func.func @transform_2(%arg0: i32, %arg1: i32) -> (i32, i32) {
    %c0_i32 = arith.constant 0 : i32
    %c0_i32_0 = arith.constant 0 : i32
    return %arg1, %c0_i32 : i32, i32
  }
  func.func @transform_3(%arg0: i32, %arg1: i32) -> (i32, i32, i32) {
    %c0_i32 = arith.constant 0 : i32
    %c0_i32_0 = arith.constant 0 : i32
    %c0_i32_1 = arith.constant 0 : i32
    return %arg0, %c0_i32, %c0_i32_0 : i32, i32, i32
  }
  func.func @transform_4(%arg0: i32, %arg1: i32) -> (i32, i32, i32, i32) {
    %c0_i32 = arith.constant 0 : i32
    %c0_i32_0 = arith.constant 0 : i32
    %c0_i32_1 = arith.constant 0 : i32
    return %arg0, %arg1, %c0_i32, %c0_i32_0 : i32, i32, i32, i32
  }
}

</mosaic_0001>

<llo_original>
// kernel: tpu_custom_call.1
$region0: #{tpu_custom_call.1}
  #allocation0 [shape = 'u32[]', space=smem, size = 0x4, offset = 0x4, fixed_abs, tag = 'smem constant byte address 0x4 - core index']
  #allocation1 [shape = 'u32[144,128]{1,0:T(1,128)}', space=vmem, size = 0x12000, scoped, tag = 'internal scratch']
  #allocation2 [shape = 'f32[16,1]{1,0:T(8,128)}', space=vmem, size = 0x2000, scoped, tag = 'scratch operand']
  #allocation3 [shape = 'f32[16,1]{1,0:T(8,128)}', space=vmem, size = 0x2000, scoped, tag = 'scratch operand']
  #allocation4 [shape = 'f32[1,1]{1,0:T(1,128)S(6)}', space=smem, size = 0x200, scoped, tag = 'scoped memory for tpu_custom_call.1']
  %s0 = inlined_call_operand.<no memory space> [shape: f32[1,1], index: 0, kind: input, shape index: {}]
  %s1 = inlined_call_operand.hbm [shape: bf16[16,32], index: 1, kind: input, shape index: {}]
  %s2 = inlined_call_operand.hbm [shape: bf16[16,32], index: 2, kind: input, shape index: {}]
  %s3 = inlined_call_operand.vmem [shape: f32[1,16,1], index: 3, kind: output, shape index: {0}]
  %s4 = inlined_call_operand.hbm [shape: f32[1,1,1,16], index: 4, kind: output, shape index: {1}]
  %5 = xla_tuple %s3, %s4
  %s6 = sld [smem:[#allocation0]]
  $region50: #{tpu_custom_call.1} parent=0
    _
  %s8 = ssub.s32 1, %s6
  %s9 = scalar_select 0, %s8, %s6
  %10 = sst [smem:[#allocation4]] %s0
  $region1: #{tpu_custom_call.1} parent=0
    #allocation5 [shape = 'u8[4096]{0}', space=vmem, size = 0x1000, scoped, tag = 'input window, operand 1, single buffered']
    #allocation6 [shape = 's32[1]{0}', space=sflag, size = 0x4, scoped, tag = 'scoped memory for tpu_custom_call.1']
    #allocation7 [shape = 's32[1]{0}', space=sflag, size = 0x4, scoped, tag = 'scoped memory for tpu_custom_call.1']
    #allocation8 [shape = 'u8[4096]{0}', space=vmem, size = 0x1000, scoped, tag = 'input window, operand 2, single buffered']
    #allocation9 [shape = 's32[1]{0}', space=sflag, size = 0x4, scoped, tag = 'scoped memory for tpu_custom_call.1']
    #allocation10 [shape = 'u8[512]{0}', space=vmem, size = 0x400, scoped, tag = 'output window, operand 1, single buffered']
    %11 = vsyncpa [#allocation6], 0
    %12 = vsyncpa [#allocation9], 0
    %13 = vsyncpa [#allocation7], 0
    // Predicated region
    $region2: #{tpu_custom_call.1} parent=1 // pred_check
      _
    $region3: #{tpu_custom_call.1} parent=1 // pred_check_branch
      %15 = sbr.rel (0) target = $region5
    $region4: #{tpu_custom_call.1} parent=1 // pred_region
      _
    $region5: #{tpu_custom_call.1} parent=1 // pred_fallthru
      _
    // Predicated region
    $region6: #{tpu_custom_call.1} parent=1 // pred_check
      _
    $region7: #{tpu_custom_call.1} parent=1 // pred_check_branch
      %17 = sbr.rel (0) target = $region9
    $region8: #{tpu_custom_call.1} parent=1 // pred_region
      %s19 = ssub.s32 128, 128
      %20 = vsyncadd [#allocation6], %s19
      %s21 = sshll.u32 [#allocation5], 4
      %s22 = int_to_ptr.vmem [resolvable:$true] %s21
      %27 = dma.hbm_to_vmem [thread:$0]  %s1, 128, %s22, [#allocation6], 64, 64, 4
    $region9: #{tpu_custom_call.1} parent=1 // pred_fallthru
      _
    // Predicated region
    $region10: #{tpu_custom_call.1} parent=1 // pred_check
      _
    $region11: #{tpu_custom_call.1} parent=1 // pred_check_branch
      %29 = sbr.rel (0) target = $region13
    $region12: #{tpu_custom_call.1} parent=1 // pred_region
      %s31 = ssub.s32 128, 128
      %32 = vsyncadd [#allocation9], %s31
      %s33 = sshll.u32 [#allocation8], 4
      %s34 = int_to_ptr.vmem [resolvable:$true] %s33
      %39 = dma.hbm_to_vmem [thread:$0]  %s2, 128, %s34, [#allocation9], 64, 64, 4
    $region13: #{tpu_custom_call.1} parent=1 // pred_fallthru
      _
    // Predicated region
    $region14: #{tpu_custom_call.1} parent=1 // pred_check
      _
    $region15: #{tpu_custom_call.1} parent=1 // pred_check_branch
      %41 = sbr.rel (0) target = $region17
    $region16: #{tpu_custom_call.1} parent=1 // pred_region
      %42 = dma.done [#allocation6], 128
    $region17: #{tpu_custom_call.1} parent=1 // pred_fallthru
      _
    // Predicated region
    $region18: #{tpu_custom_call.1} parent=1 // pred_check
      _
    $region19: #{tpu_custom_call.1} parent=1 // pred_check_branch
      %44 = sbr.rel (0) target = $region21
    $region20: #{tpu_custom_call.1} parent=1 // pred_region
      %45 = dma.done [#allocation9], 128
    $region21: #{tpu_custom_call.1} parent=1 // pred_fallthru
      _
    %s47 = sld [smem:[#allocation4]]
    %v48 = vld [vmem:[#allocation5] sm:$0xf]
    %v49 = vld [vmem:[#allocation5 + $0x4] sm:$0xf]
    %v50 = vld [vmem:[#allocation8] sm:$0xf]
    %v51 = vld [vmem:[#allocation8 + $0x4] sm:$0xf]
    %v54 = vunpack.c.l.b16 %v48
    %v55 = vunpack.c.l.b16 %v49
    %v56 = vpack.c.b16 %v55, %v54
    %v59 = vunpack.c.l.b16 %v50
    %v60 = vunpack.c.l.b16 %v51
    %v61 = vpack.c.b16 %v60, %v59
    %vm62 = vcmask 261120
    %v64 = vsel %vm62, %v56, 0
    %v67 = vsel %vm62, %v61, 0
    %69 = vmatprep.subr.bf16.mxu0 0
    %70 = vmatpush1.bf16.xpose.msra.mxu0 %v67
    %71 = vmatprep.subr.bf16.mxu0 0
    %72 = vmatpush1.bf16.xpose.msra.mxu0 0
    %73 = vmatprep.subr.bf16.mxu0 0
    %74 = vmatpush1.bf16.xpose.msra.mxu0 0
    %75 = vmatprep.subr.bf16.mxu0 0
    %76 = vmatpush1.bf16.xpose.msra.mxu0 0
    %77 = vmatprep.subr.bf16.mxu0 0
    %78 = vmatpush1.bf16.xpose.msra.mxu0 0
    %79 = vmatprep.subr.bf16.mxu0 0
    %80 = vmatpush1.bf16.xpose.msra.mxu0 0
    %81 = vmatprep.subr.bf16.mxu0 0
    %82 = vmatpush1.bf16.xpose.msra.mxu0 0
    %83 = vmatprep.subr.bf16.mxu0 0
    %84 = vmatpush1.bf16.xpose.msra.mxu0 0
    %85 = vmatprep.subr.bf16.mxu0 0
    %86 = vmatpush1.bf16.xpose.msra.mxu0 0
    %87 = vmatprep.subr.bf16.mxu0 0
    %88 = vmatpush1.bf16.xpose.msra.mxu0 0
    %89 = vmatprep.subr.bf16.mxu0 0
    %90 = vmatpush1.bf16.xpose.msra.mxu0 0
    %91 = vmatprep.subr.bf16.mxu0 0
    %92 = vmatpush1.bf16.xpose.msra.mxu0 0
    %93 = vmatprep.subr.bf16.mxu0 0
    %94 = vmatpush1.bf16.xpose.msra.mxu0 0
    %95 = vmatprep.subr.bf16.mxu0 0
    %96 = vmatpush1.bf16.xpose.msra.mxu0 0
    %97 = vmatprep.subr.bf16.mxu0 0
    %98 = vmatpush1.bf16.xpose.msra.mxu0 0
    %99 = vmatprep.subr.bf16.mxu0 0
    %100 = vmatpush1.bf16.xpose.msra.mxu0 0
    %101 = vmatprep.mubr.bf16.mxu0 0
    %102 = vmatmul.mubr.bf16.gmra.mrb[0].mxu0 %v64
    %v103 = vpop.f32.mrb[0].mxu0
    %v104 = vadd.f32 0.0, %v103
    %v105 = vpop.f32.mrb[0].mxu0
    %v106 = vpop.f32.mrb[0].mxu0
    %v107 = vadd.f32 0.0, %v106
    %v108 = vpop.f32.mrb[0].mxu0
    %109 = vdwg.mxu0
    %v110 = vstv %s47
    %v111 = vmul.f32 %v104, %v110
    %v112 = vmul.f32 %v107, %v110
    %p113 = scmp.eq.s32.totalorder 0, 0
    // Predicated region
    $region22: #{tpu_custom_call.1} parent=1 // pred_check
      %p114 = pneg %p113
    $region23: #{tpu_custom_call.1} parent=1 // pred_check_branch
      %116 = sbr.rel (%p114) target = $region25
    $region24: #{tpu_custom_call.1} parent=1 // pred_region
      %vm117 = vcmask 7168
      %118 = vst.msk [vmem:[#allocation2] sm:$0xff] %vm117, -inf
      %119 = vst.msk [vmem:[#allocation2 + $0x8] sm:$0xff] %vm117, -inf
      %120 = vst.msk [vmem:[#allocation3] sm:$0xff] %vm117, 0.0
      %121 = vst.msk [vmem:[#allocation3 + $0x8] sm:$0xff] %vm117, 0.0
      %122 = vst.msk [vmem:[%s3] sm:$0xff] %vm117, 0.0
      %123 = vst.msk [vmem:[%s3 + $0x8] sm:$0xff] %vm117, 0.0
    $region25: #{tpu_custom_call.1} parent=1 // pred_fallthru
      _
    %v124 = vld [vmem:[#allocation2] sm:$0xff]
    %v125 = vld [vmem:[#allocation2 + $0x8] sm:$0xff]
    %vm126 = vcmask 130048
    %v127 = vsel %vm126, %v111, -inf
    %128 = vmax.xlane.f32.xlu0 %v127
    %v129 = vpop.xlane.xlu0 %128
    %v130 = vsel %vm126, %v112, -inf
    %131 = vmax.xlane.f32.xlu0 %v130
    %v132 = vpop.xlane.xlu0 %131
    %v133 = vmax.f32 %v124, %v129
    %v134 = vmax.f32 %v125, %v132
    %v135 = vld [vmem:[#allocation3] sm:$0xff]
    %v136 = vld [vmem:[#allocation3 + $0x8] sm:$0xff]
    %v137 = vsub.f32 %v124, %v133
    %v138 = vsub.f32 %v125, %v134
    %v139 = vmul.f32 %v137, 1.442695
    %v140 = vpow.pop %v139
    %v141 = vmul.f32 %v138, 1.442695
    %v142 = vpow.pop %v141
    %v143 = vmul.f32 %v135, %v140
    %v144 = vmul.f32 %v136, %v142
    %146 = vset.pattern.permute.xlu0 0
    %147 = vperm.xlu0 %146, %v133
    %v148 = vpop.permute.xlu0 %147
    %151 = vset.pattern.permute.xlu0 0
    %152 = vperm.xlu0 %151, %v134
    %v153 = vpop.permute.xlu0 %152
    %v155 = vsub.f32 %v111, %v148
    %v156 = vsub.f32 %v112, %v153
    %v157 = vmul.f32 %v155, 1.442695
    %v158 = vpow.pop %v157
    %v159 = vmul.f32 %v156, 1.442695
    %v160 = vpow.pop %v159
    %v161 = vsel %vm126, %v158, 0.0
    %162 = vadd.xlane.f32.xlu0 %v161
    %v163 = vpop.xlane.xlu0 %162
    %v164 = vsel %vm126, %v160, 0.0
    %165 = vadd.xlane.f32.xlu0 %v164
    %v166 = vpop.xlane.xlu0 %165
    %v167 = vadd.f32 %v143, %v163
    %v168 = vadd.f32 %v144, %v166
    %vm169 = vcmask 7168
    %170 = vst.msk [vmem:[#allocation3] sm:$0xff] %vm169, %v167
    %171 = vst.msk [vmem:[#allocation3 + $0x8] sm:$0xff] %vm169, %v168
    %172 = vst.msk [vmem:[#allocation2] sm:$0xff] %vm169, %v133
    %173 = vst.msk [vmem:[#allocation2 + $0x8] sm:$0xff] %vm169, %v134
    %v174 = vmax.f32 %v127, %v130
    %v175 = vrot.slane %v174, 4
    %v176 = vmax.f32 %v174, %v175
    %v177 = vrot.slane %v176, 2
    %v178 = vmax.f32 %v176, %v177
    %v179 = vrot.slane %v178, 1
    %v180 = vmax.f32 %v178, %v179
    %v181 = vsub.f32 %v111, %v180
    %v182 = vsub.f32 %v112, %v180
    %v183 = vmul.f32 %v181, 1.442695
    %v184 = vpow.pop %v183
    %v185 = vmul.f32 %v182, 1.442695
    %v186 = vpow.pop %v185
    %v187 = vsel %vm126, %v184, 0.0
    %v188 = vsel %vm126, %v186, 0.0
    %v189 = vadd.f32 %v187, %v188
    %v190 = vrot.slane %v189, 4
    %v191 = vadd.f32 %v189, %v190
    %v192 = vrot.slane %v191, 2
    %v193 = vadd.f32 %v191, %v192
    %v194 = vrot.slane %v193, 1
    %v195 = vadd.f32 %v193, %v194
    %v196 = vlog2.pop %v195
    %v197 = vmul.f32 %v196, 0.6931472
    %v198 = vadd.f32 %v180, %v197
    %vm199 = vcmask 122880
    %200 = vst.msk [vmem:[#allocation10] sm:$0x1] %vm199, %v198
    %s201 = smul.u32 0, 16
    %s202 = smul.u32 0, 16
    %p203 = scmp.gt.s32.totalorder %s201, %s202
    %s204 = scalar_select %p203, %s201, %s202
    %s205 = sadd.s32 0, 1
    %s206 = smul.u32 %s205, 16
    %s207 = sadd.s32 0, 1
    %s208 = smul.u32 %s207, 16
    %p209 = scmp.lt.s32.totalorder %s206, %s208
    %s210 = scalar_select %p209, %s206, %s208
    %p211 = scmp.lt.s32.totalorder %s204, %s210
    // Predicated region
    $region26: #{tpu_custom_call.1} parent=1 // pred_check
      %p212 = pneg %p211
    $region27: #{tpu_custom_call.1} parent=1 // pred_check_branch
      %214 = sbr.rel (%p212) target = $region29
    $region28: #{tpu_custom_call.1} parent=1 // pred_region
      %v215 = vlaneseq
      %v216 = vshrl.u32 %v215, 7
      %v217 = vadd.s32 %v216, 8
      %v218 = vstv %s201
      %v219 = vadd.s32 %v218, %v216
      %v220 = vadd.s32 %v218, %v217
      %v221 = vlaneseq
      %v222 = vand.u32 %v221, 127
      %v223 = vstv %s202
      %v224 = vadd.s32 %v223, %v222
      %vm225 = vcmp.eq.s32.totalorder %v219, %v224
      %vm226 = vcmp.eq.s32.totalorder %v220, %v224
      %v227 = vsel %vm225, %v111, 0.0
      %v228 = vsel %vm226, %v112, 0.0
      %v229 = vsel %vm126, %v227, 0.0
      %230 = vadd.xlane.f32.xlu0 %v229
      %v231 = vpop.xlane.xlu0 %230
      %v232 = vsel %vm126, %v228, 0.0
      %233 = vadd.xlane.f32.xlu0 %v232
      %v234 = vpop.xlane.xlu0 %233
      %v235 = vld [vmem:[%s3] sm:$0xff]
      %v236 = vld [vmem:[%s3 + $0x8] sm:$0xff]
      %v237 = vmul.f32 %v231, -2.0
      %v238 = vmul.f32 %v234, -2.0
      %v239 = vadd.f32 %v235, %v237
      %v240 = vadd.f32 %v236, %v238
      %241 = vst.msk [vmem:[%s3] sm:$0xff] %vm169, %v239
      %242 = vst.msk [vmem:[%s3 + $0x8] sm:$0xff] %vm169, %v240
    $region29: #{tpu_custom_call.1} parent=1 // pred_fallthru
      _
    // Predicated region
    $region30: #{tpu_custom_call.1} parent=1 // pred_check
      %p243 = pneg %p113
    $region31: #{tpu_custom_call.1} parent=1 // pred_check_branch
      %245 = sbr.rel (%p243) target = $region33
    $region32: #{tpu_custom_call.1} parent=1 // pred_region
      %v246 = vld [vmem:[#allocation2] sm:$0xff]
      %v247 = vld [vmem:[#allocation2 + $0x8] sm:$0xff]
      %v248 = vld [vmem:[#allocation3] sm:$0xff]
      %v249 = vld [vmem:[#allocation3 + $0x8] sm:$0xff]
      %v250 = vlog2.pop %v248
      %v251 = vmul.f32 %v250, 0.6931472
      %v252 = vlog2.pop %v249
      %v253 = vmul.f32 %v252, 0.6931472
      %v254 = vadd.f32 %v246, %v251
      %v255 = vadd.f32 %v247, %v253
      %v256 = vld [vmem:[%s3] sm:$0xff]
      %v257 = vld [vmem:[%s3 + $0x8] sm:$0xff]
      %v258 = vadd.f32 %v256, %v254
      %v259 = vadd.f32 %v257, %v255
      %260 = vst.msk [vmem:[%s3] sm:$0xff] %vm169, %v258
      %261 = vst.msk [vmem:[%s3 + $0x8] sm:$0xff] %vm169, %v259
    $region33: #{tpu_custom_call.1} parent=1 // pred_fallthru
      _
    // Predicated region
    $region34: #{tpu_custom_call.1} parent=1 // pred_check
      _
    $region35: #{tpu_custom_call.1} parent=1 // pred_check_branch
      %263 = sbr.rel (0) target = $region37
    $region36: #{tpu_custom_call.1} parent=1 // pred_region
      _
    $region37: #{tpu_custom_call.1} parent=1 // pred_fallthru
      _
    // Predicated region
    $region38: #{tpu_custom_call.1} parent=1 // pred_check
      _
    $region39: #{tpu_custom_call.1} parent=1 // pred_check_branch
      %265 = sbr.rel (0) target = $region41
    $region40: #{tpu_custom_call.1} parent=1 // pred_region
      %s267 = ssub.s32 16, 16
      %268 = vsyncadd [#allocation7], %s267
      %s270 = sshll.u32 [#allocation10], 4
      %s271 = int_to_ptr.vmem [resolvable:$true] %s270
      %273 = dma.vmem_to_hbm [thread:$0]  %s271, 16, %s4, [#allocation7]
    $region41: #{tpu_custom_call.1} parent=1 // pred_fallthru
      _
    // Predicated region
    $region42: #{tpu_custom_call.1} parent=1 // pred_check
      _
    $region43: #{tpu_custom_call.1} parent=1 // pred_check_branch
      %275 = sbr.rel (0) target = $region45
    $region44: #{tpu_custom_call.1} parent=1 // pred_region
      _
    $region45: #{tpu_custom_call.1} parent=1 // pred_fallthru
      _
    // Predicated region
    $region46: #{tpu_custom_call.1} parent=1 // pred_check
      _
    $region47: #{tpu_custom_call.1} parent=1 // pred_check_branch
      %277 = sbr.rel (0) target = $region49
    $region48: #{tpu_custom_call.1} parent=1 // pred_region
      %278 = dma.done [#allocation7], 16
    $region49: #{tpu_custom_call.1} parent=1 // pred_fallthru
      _
    %279 = vsyncpa [#allocation6], 1
    %280 = vsyncpa [#allocation9], 1
    %281 = vsyncpa [#allocation7], 1

</llo_original>
